<compile_context>
chip_gen: v7x
topology: tpu7x:2x2x1
jax: 0.10.0
libtpu: 0.0.40
codegen_flags: <defaults>
</compile_context>

<pallas_src>
import math

import jax
import jax.numpy as jnp
from jax.experimental import pallas as pl
from jax.experimental.pallas import tpu as pltpu

_LANES = 128
_SUBLANES = 8
_X_TILE_BYTES = 2 * 1024 * 1024   # target footprint of one x tile


def build_pe(d_model: int, max_len: int = 5000) -> jnp.ndarray:
    """Replicates the PyTorch buffer construction exactly (float32)."""
    width = (d_model + 1) // 2 * 2
    position = jnp.arange(0, max_len, dtype=jnp.float32)[:, None]        # (max_len, 1)
    div_term = jnp.exp(
        jnp.arange(0, d_model, 2, dtype=jnp.float32)
        * -(math.log(10000.0) / d_model)
    )
    sin = jnp.sin(position * div_term)
    cos = jnp.cos(position * div_term)
    pe = jnp.zeros((max_len, width), dtype=jnp.float32)
    pe = pe.at[:, 0::2].set(sin)
    pe = pe.at[:, 1::2].set(cos)
    return pe[None, :, :]                                                # (1, max_len, width)


def _round_up(x: int, m: int) -> int:
    return (x + m - 1) // m * m


def _tiling(batch: int, seq_len: int, d_model: int, itemsize: int):
    """Lane-dense tiling: flatten (L, D) -> W and view it as R rows of 128 lanes."""
    W = seq_len * d_model
    R = pl.cdiv(W, _LANES)                       # raw 128-lane rows per batch elem
    # Rows per tile: multiple of 8 (sublane rule), sized so one x tile ~= 2 MiB.
    budget_rows = max(
        _SUBLANES,
        (_X_TILE_BYTES // max(1, batch * _LANES * itemsize)) // _SUBLANES * _SUBLANES,
    )
    tile_rows = min(budget_rows, _round_up(R, _SUBLANES))
    r_pad = _round_up(R, tile_rows)
    return W, tile_rows, r_pad


def prepare_pe(pe: jnp.ndarray, batch: int, seq_len: int, d_model: int,
               dtype=jnp.float32) -> jnp.ndarray:
    """Init-time (hoisted) prep: pe[:, :L, :-1] slice, cast to activation dtype,
    flatten + pad into the lane-dense (1, R_pad, 128) slab the kernel consumes."""
    width = pe.shape[-1]
    assert width - 1 == d_model, (
        "PositionalEmbedding add is only shape-consistent for odd d_model "
        "(pe[:, :, :-1] must have exactly d_model columns)")
    W, _, r_pad = _tiling(batch, seq_len, d_model, jnp.dtype(dtype).itemsize)
    pe_flat = pe[0, :seq_len, :d_model].astype(dtype).reshape(1, W)
    pe_flat = jnp.pad(pe_flat, ((0, 0), (0, r_pad * _LANES - W)))
    return pe_flat.reshape(1, r_pad, _LANES)


def _add_pe_kernel(x_ref, pe_ref, o_ref):
    # x_ref: (B, tile_rows, 128); pe_ref: (1, tile_rows, 128) broadcast over batch.
    o_ref[...] = x_ref[...] + pe_ref[...]


def positional_embedding_forward(x: jnp.ndarray, pe_prepared: jnp.ndarray) -> jnp.ndarray:
    """x: (B, L, D); pe_prepared: output of prepare_pe(pe, B, L, D, x.dtype)."""
    B, L, D = x.shape
    itemsize = jnp.dtype(x.dtype).itemsize
    W, tile_rows, r_pad = _tiling(B, L, D, itemsize)
    assert pe_prepared.shape == (1, r_pad, _LANES) and pe_prepared.dtype == x.dtype, (
        "pe_prepared must come from prepare_pe() with matching batch/seq/d_model/dtype")

    pad = r_pad * _LANES - W
    x_flat = x.reshape(B, W)
    if pad:
        # Only needed when L*D is not a multiple of tile_rows*128; otherwise the
        # reshape below is a free bitcast and no copy of x is issued.
        x_flat = jnp.pad(x_flat, ((0, 0), (0, pad)))
    x3 = x_flat.reshape(B, r_pad, _LANES)

    grid = (r_pad // tile_rows,)
    out = pl.pallas_call(
        _add_pe_kernel,
        out_shape=jax.ShapeDtypeStruct((B, r_pad, _LANES), x.dtype),
        grid_spec=pltpu.PrefetchScalarGridSpec(
            num_scalar_prefetch=0,
            grid=grid,
            in_specs=[
                pl.BlockSpec((B, tile_rows, _LANES), lambda j: (0, j, 0)),
                pl.BlockSpec((1, tile_rows, _LANES), lambda j: (0, j, 0)),
            ],
            out_specs=pl.BlockSpec((B, tile_rows, _LANES), lambda j: (0, j, 0)),
        ),
        compiler_params=pltpu.CompilerParams(
            dimension_semantics=("parallel",)),
        # Reuse the freshly padded x buffer for the output (only when it is a
        # guaranteed temporary, so XLA never inserts a defensive copy).
        input_output_aliases=({0: 0} if pad else {}),
    )(x3, pe_prepared)

    return out.reshape(B, r_pad * _LANES)[:, :W].reshape(B, L, D)


if __name__ == "__main__":
    # d_model odd so pe[..., :-1] has exactly d_model columns (as the module intends).
    d_model = 31
    max_len = 64
    B, L = 2, 8

    key = jax.random.PRNGKey(0)
    x = jax.random.normal(key, (B, L, d_model), dtype=jnp.float32)

    pe = build_pe(d_model, max_len)                              # torch buffer equivalent
    pe_prepared = prepare_pe(pe, B, L, d_model, dtype=x.dtype)   # hoisted, init-time

    fwd = jax.jit(positional_embedding_forward)
    out = jax.block_until_ready(fwd(x, pe_prepared))

    # Reference check (mirrors the PyTorch forward exactly).
    ref = x + pe[:, :L, :-1]
    assert out.shape == (B, L, d_model)
    assert jnp.allclose(out, ref, atol=1e-6), "mismatch vs reference"

    print("KERNEL_OK")
</pallas_src>

<mosaic_0001>
module attributes {stable_mosaic.version = 11 : i64} {
  func.func @_add_pe_kernel(%arg0: i32, %arg1: memref<2x8x128xf32, #tpu.memory_space<vmem>>, %arg2: memref<1x8x128xf32, #tpu.memory_space<vmem>>, %arg3: memref<2x8x128xf32, #tpu.memory_space<vmem>>) attributes {dimension_semantics = [#tpu.dimension_semantics<parallel>], iteration_bounds = array<i64: 1>, scalar_prefetch = 0 : i64, scratch_operands = 0 : i64, tpu.core_type = #tpu.core_type<tc>, window_params = [{transform_indices = @transform_0, window_bounds = array<i64: 2, 8, 128>}, {transform_indices = @transform_1, window_bounds = array<i64: 1, 8, 128>}, {transform_indices = @transform_2, window_bounds = array<i64: 2, 8, 128>}]} {
    %c0 = arith.constant 0 : index
    %c0_0 = arith.constant 0 : index
    %c0_1 = arith.constant 0 : index
    %0 = vector.load %arg1[%c0, %c0_0, %c0_1] : memref<2x8x128xf32, #tpu.memory_space<vmem>>, vector<2x8x128xf32>
    %c0_2 = arith.constant 0 : index
    %c0_3 = arith.constant 0 : index
    %c0_4 = arith.constant 0 : index
    %1 = vector.load %arg2[%c0_2, %c0_3, %c0_4] : memref<1x8x128xf32, #tpu.memory_space<vmem>>, vector<1x8x128xf32>
    %2 = vector.broadcast %1 : vector<1x8x128xf32> to vector<2x8x128xf32>
    %3 = arith.addf %0, %2 : vector<2x8x128xf32>
    %c0_5 = arith.constant 0 : index
    %c0_6 = arith.constant 0 : index
    %c0_7 = arith.constant 0 : index
    %4 = vector.load %arg3[%c0_5, %c0_6, %c0_7] : memref<2x8x128xf32, #tpu.memory_space<vmem>>, vector<2x8x128xf32>
    tpu.vector_store %arg3[%c0_5, %c0_6, %c0_7], %3 {strides = array<i32>} : memref<2x8x128xf32, #tpu.memory_space<vmem>>, vector<2x8x128xf32>,
    return
  }
  func.func @transform_0(%arg0: i32) -> (i32, i32, i32) {
    %c0_i32 = arith.constant 0 : i32
    %c0_i32_0 = arith.constant 0 : i32
    %c0_i32_1 = arith.constant 0 : i32
    return %c0_i32, %arg0, %c0_i32_0 : i32, i32, i32
  }
  func.func @transform_1(%arg0: i32) -> (i32, i32, i32) {
    %c0_i32 = arith.constant 0 : i32
    %c0_i32_0 = arith.constant 0 : i32
    %c0_i32_1 = arith.constant 0 : i32
    return %c0_i32, %arg0, %c0_i32_0 : i32, i32, i32
  }
  func.func @transform_2(%arg0: i32) -> (i32, i32, i32) {
    %c0_i32 = arith.constant 0 : i32
    %c0_i32_0 = arith.constant 0 : i32
    %c0_i32_1 = arith.constant 0 : i32
    return %c0_i32, %arg0, %c0_i32_0 : i32, i32, i32
  }
}

</mosaic_0001>

<llo_original>
// kernel: positional_embedding_forward.1
$region0: #{positional_embedding_forward.1}
  #allocation0 [shape = 'u32[]', space=smem, size = 0x4, offset = 0x4, fixed_abs, tag = 'smem constant byte address 0x4 - core index']
  #allocation1 [shape = 'u32[144,128]{1,0:T(1,128)}', space=vmem, size = 0x12000, scoped, tag = 'internal scratch']
  %s0 = inlined_call_operand.vmem [shape: f32[2,8,128], index: 0, kind: input, shape index: {}, may-alias: {0,2}]
  %s1 = inlined_call_operand.vmem [shape: f32[1,8,128], index: 1, kind: input, shape index: {}]
  %s2 = inlined_call_operand.vmem [shape: f32[2,8,128], index: 2, kind: output, shape index: {}, may-alias: {0,2}]
  %s3 = sld [smem:[#allocation0]]
  $region18: #{positional_embedding_forward.1} parent=0
    _
  %s5 = ssub.s32 1, %s3
  %s6 = scalar_select 0, %s5, %s3
  // Predicated region
  $region2: #{positional_embedding_forward.1} parent=0 // pred_check
    _
  $region3: #{positional_embedding_forward.1} parent=0 // pred_check_branch
    %8 = sbr.rel (0) target = $region5
  $region4: #{positional_embedding_forward.1} parent=0 // pred_region
    _
  $region5: #{positional_embedding_forward.1} parent=0 // pred_fallthru
    _
  // Predicated region
  $region6: #{positional_embedding_forward.1} parent=0 // pred_check
    _
  $region7: #{positional_embedding_forward.1} parent=0 // pred_check_branch
    %10 = sbr.rel (0) target = $region9
  $region8: #{positional_embedding_forward.1} parent=0 // pred_region
    _
  $region9: #{positional_embedding_forward.1} parent=0 // pred_fallthru
    _
  %v11 = vld [vmem:[%s0] sm:$0xff]
  %v12 = vld [vmem:[%s0 + $0x8] sm:$0xff]
  %v13 = vld [vmem:[%s1] sm:$0xff]
  %v14 = vadd.f32 %v11, %v13
  %v15 = vadd.f32 %v12, %v13
  %16 = vst [vmem:[%s2] sm:$0xff] %v14
  %17 = vst [vmem:[%s2 + $0x8] sm:$0xff] %v15
  // Predicated region
  $region10: #{positional_embedding_forward.1} parent=0 // pred_check
    _
  $region11: #{positional_embedding_forward.1} parent=0 // pred_check_branch
    %19 = sbr.rel (0) target = $region13
  $region12: #{positional_embedding_forward.1} parent=0 // pred_region
    _
  $region13: #{positional_embedding_forward.1} parent=0 // pred_fallthru
    _
  // Predicated region
  $region14: #{positional_embedding_forward.1} parent=0 // pred_check
    _
  $region15: #{positional_embedding_forward.1} parent=0 // pred_check_branch
    %21 = sbr.rel (0) target = $region17
  $region16: #{positional_embedding_forward.1} parent=0 // pred_region
    _
  $region17: #{positional_embedding_forward.1} parent=0 // pred_fallthru
    _

</llo_original>
